<compile_context>
chip_gen: v7x
topology: tpu7x:2x2x1
jax: 0.10.0
libtpu: 0.0.40
codegen_flags: <defaults>
</compile_context>

<pallas_src>
import functools

import jax
import jax.numpy as jnp
from jax import lax
from jax.experimental import pallas as pl
from jax.experimental.pallas import tpu as pltpu

ALPHA = 0.5
BETA = 0.5


def _round_up(x, m):
    return (x + m - 1) // m * m


def _pick_tile(total, candidates):
    for c in candidates:
        if total % c == 0:
            return c
    return total


# --------------------------- content MSE ---------------------------

def _content_mse_kernel(xc_ref, co_ref, out_ref, acc_ref, *, inv_numel):
    i = pl.program_id(0)

    @pl.when(i == 0)
    def _():
        acc_ref[...] = jnp.zeros_like(acc_ref)

    d = xc_ref[...] - co_ref[...]
    acc_ref[...] += jnp.sum(d * d, keepdims=True)          # (1, 1)

    @pl.when(i == pl.num_programs(0) - 1)
    def _():
        out_ref[...] = acc_ref[...] * inv_numel             # single write at the end


def _content_mse(xc2, co2, *, true_numel, tm):
    Rp, Kcp = xc2.shape
    kern = functools.partial(_content_mse_kernel, inv_numel=1.0 / float(true_numel))
    out = pl.pallas_call(
        kern,
        out_shape=jax.ShapeDtypeStruct((1, 1), jnp.float32),
        grid_spec=pltpu.PrefetchScalarGridSpec(
            num_scalar_prefetch=0,
            grid=(Rp // tm,),
            in_specs=[
                pl.BlockSpec((tm, Kcp), lambda i: (i, 0)),
                pl.BlockSpec((tm, Kcp), lambda i: (i, 0)),
            ],
            out_specs=pl.BlockSpec((1, 1), lambda i: (0, 0)),
            scratch_shapes=[pltpu.VMEM((1, 1), jnp.float32)],
        ),
        compiler_params=pltpu.CompilerParams(
            dimension_semantics=("arbitrary",),
        ),
    )(xc2, co2)
    return out[0, 0]


# --------------------------- style Gram losses ---------------------------

def _style_gram_kernel(xs_ref, so_ref, out_ref, gx_ref, gs_ref, *, inv_numel):
    k = pl.program_id(1)

    @pl.when(k == 0)
    def _():
        gx_ref[...] = jnp.zeros_like(gx_ref)
        gs_ref[...] = jnp.zeros_like(gs_ref)

    x = xs_ref[0]                              # (Cs_p, tk)
    s = so_ref[0]                              # (Cs_p, tk)
    # Contract the last dim of both operands: x @ x.T with no materialized transpose.
    dn = (((1,), (1,)), ((), ()))
    gx_ref[...] += lax.dot_general(x, x, dn, preferred_element_type=jnp.float32)
    gs_ref[...] += lax.dot_general(s, s, dn, preferred_element_type=jnp.float32)

    @pl.when(k == pl.num_programs(1) - 1)
    def _():
        d = gx_ref[...] - gs_ref[...]          # raw (unscaled) Gram difference
        # Deferred scaling: ||Gx - Gs||_F^2 = inv_numel^2 * ||Gx_raw - Gs_raw||_F^2
        out_ref[...] = (inv_numel * inv_numel) * jnp.sum(d * d, keepdims=True)


def _style_losses(xs3, so3, *, true_numel, tk):
    L, Cp, Kp = xs3.shape
    kern = functools.partial(_style_gram_kernel, inv_numel=1.0 / float(true_numel))

    flops = 2 * (2 * L * Cp * Cp * Kp)                       # two Grams per layer
    bytes_accessed = 2 * L * Cp * Kp * 4 + L * 4
    # 2 inputs x 2 pipeline buffers x feature tile + 2 Gram accumulators (+ slack).
    vmem_need = 4 * (2 * 2 * Cp * tk + 2 * Cp * Cp) + (64 << 10)
    vmem_limit = int(min(64 << 20, max(4 * vmem_need, 32 << 20)))

    out = pl.pallas_call(
        kern,
        out_shape=jax.ShapeDtypeStruct((L, 1), jnp.float32),
        grid_spec=pltpu.PrefetchScalarGridSpec(
            num_scalar_prefetch=0,
            grid=(L, Kp // tk),
            in_specs=[
                pl.BlockSpec((1, Cp, tk), lambda l, k: (l, 0, k)),
                pl.BlockSpec((1, Cp, tk), lambda l, k: (l, 0, k)),
            ],
            out_specs=pl.BlockSpec((1, 1), lambda l, k: (l, 0)),
            scratch_shapes=[
                pltpu.VMEM((Cp, Cp), jnp.float32),
                pltpu.VMEM((Cp, Cp), jnp.float32),
            ],
        ),
        compiler_params=pltpu.CompilerParams(
            dimension_semantics=("parallel", "arbitrary"),   # layers across TCs, K sequential
            vmem_limit_bytes=vmem_limit,
        ),
        cost_estimate=pl.CostEstimate(
            flops=int(flops), transcendentals=0, bytes_accessed=int(bytes_accessed)),
    )(xs3, so3)
    return out[:, 0]


# --------------------------- wrapper ---------------------------

def style_transfer_loss(X_content, X_style, content_out, style_out,
                        alpha=ALPHA, beta=BETA):
    """X_content/content_out: (B, C, H, W). X_style/style_out: (L, 1, Cs, Hs, Ws).

    Style layers are stacked, so they must share one (Cs, Hs, Ws) shape; heterogeneous
    real-VGG layers would get one _style_losses call per distinct shape.
    """
    B, C, H, W = X_content.shape
    L, Bs, Cs, Hs, Ws = X_style.shape
    assert Bs == 1, "Gram() assumes batch-1 style feature maps (standard style transfer)"

    # ---- content term: (B*C, H*W), zero-padded to (mult of 8, mult of 128) ----
    R, Kc = B * C, H * W
    Rp, Kcp = _round_up(R, 8), _round_up(Kc, 128)

    def pad_content(a):
        a2 = a.reshape(R, Kc).astype(jnp.float32)
        return jnp.zeros((Rp, Kcp), jnp.float32).at[:R, :Kc].set(a2)

    xc2 = pad_content(X_content)
    co2 = pad_content(content_out)
    tm = _pick_tile(Rp, (512, 256, 128, 64, 32, 16, 8))
    content_loss = _content_mse(xc2, co2, true_numel=R * Kc, tm=tm)

    # ---- style term: (L, Cs, Hs*Ws), zero-padded to lane/sublane-aligned sizes ----
    K = Hs * Ws
    Cp, Kp = _round_up(Cs, 8), _round_up(K, 128)

    def pad_style(a):
        a2 = a.reshape(L, Cs, K).astype(jnp.float32)
        return jnp.zeros((L, Cp, Kp), jnp.float32).at[:, :Cs, :K].set(a2)

    xs3 = pad_style(X_style)
    so3 = pad_style(style_out)
    tk = _pick_tile(Kp, (2048, 1024, 512, 256, 128))
    per_layer = _style_losses(xs3, so3, true_numel=Cs * Hs * Ws, tk=tk)
    style_loss = jnp.sum(per_layer)

    return alpha * content_loss + beta * style_loss


if __name__ == "__main__":
    key = jax.random.PRNGKey(0)
    k1, k2, k3, k4 = jax.random.split(key, 4)

    B, C, H, W = 2, 4, 16, 16        # content feature map (NCHW)
    L, Cs, Hs, Ws = 3, 8, 8, 8       # L style layers, each a (1, Cs, Hs, Ws) map

    X_content = jax.random.normal(k1, (B, C, H, W), jnp.float32)
    content_out = jax.random.normal(k2, (B, C, H, W), jnp.float32)
    X_style = jax.random.normal(k3, (L, 1, Cs, Hs, Ws), jnp.float32)
    style_out = jax.random.normal(k4, (L, 1, Cs, Hs, Ws), jnp.float32)

    loss = style_transfer_loss(X_content, X_style, content_out, style_out)
    loss = jax.block_until_ready(loss)

    # Pure-JAX reference (mirrors the PyTorch forward exactly).
    def gram(x):
        f = x.reshape(x.shape[1], -1)
        return f @ f.T / x.size

    content_loss_ref = jnp.mean((X_content - content_out) ** 2)
    style_loss_ref = sum(
        jnp.sum((gram(X_style[i]) - gram(style_out[i])) ** 2) for i in range(L)
    )
    ref = ALPHA * content_loss_ref + BETA * style_loss_ref

    assert jnp.allclose(loss, ref, rtol=1e-4, atol=1e-5), (float(loss), float(ref))
    print("KERNEL_OK")
</pallas_src>

<mosaic_0001>
module attributes {stable_mosaic.version = 11 : i64} {
  func.func @_content_mse_kernel(%arg0: i32, %arg1: memref<8x256xf32, #tpu.memory_space<vmem>>, %arg2: memref<8x256xf32, #tpu.memory_space<vmem>>, %arg3: memref<1x1xf32, #tpu.memory_space<vmem>>, %arg4: memref<1x1xf32, #tpu.memory_space<vmem>>) attributes {dimension_semantics = [#tpu.dimension_semantics<arbitrary>], iteration_bounds = array<i64: 1>, scalar_prefetch = 0 : i64, scratch_operands = 1 : i64, tpu.core_type = #tpu.core_type<tc>, window_params = [{transform_indices = @transform_0, window_bounds = array<i64: 8, 256>}, {transform_indices = @transform_1, window_bounds = array<i64: 8, 256>}, {pipeline_mode = #tpu.pipeline_mode<synchronous>, transform_indices = @transform_2, window_bounds = array<i64: 1, 1>}]} {
    %c0_i32 = arith.constant 0 : i32
    %0 = arith.cmpi eq, %arg0, %c0_i32 : i32
    %1 = arith.extui %0 : i1 to i32
    %c0_i32_0 = arith.constant 0 : i32
    %2 = arith.cmpi ne, %1, %c0_i32_0 : i32
    scf.if %2 {
      %cst_10 = arith.constant 0.000000e+00 : f32
      %18 = vector.broadcast %cst_10 : f32 to vector<1x1xf32>
      %c0_11 = arith.constant 0 : index
      %c0_12 = arith.constant 0 : index
      %19 = vector.load %arg4[%c0_11, %c0_12] : memref<1x1xf32, #tpu.memory_space<vmem>>, vector<1x1xf32>
      tpu.vector_store %arg4[%c0_11, %c0_12], %18 {strides = array<i32>} : memref<1x1xf32, #tpu.memory_space<vmem>>, vector<1x1xf32>,
    } else {
    }
    %c0 = arith.constant 0 : index
    %c0_1 = arith.constant 0 : index
    %3 = vector.load %arg1[%c0, %c0_1] : memref<8x256xf32, #tpu.memory_space<vmem>>, vector<8x256xf32>
    %c0_2 = arith.constant 0 : index
    %c0_3 = arith.constant 0 : index
    %4 = vector.load %arg2[%c0_2, %c0_3] : memref<8x256xf32, #tpu.memory_space<vmem>>, vector<8x256xf32>
    %5 = arith.subf %3, %4 : vector<8x256xf32>
    %c0_4 = arith.constant 0 : index
    %c0_5 = arith.constant 0 : index
    %6 = vector.load %arg4[%c0_4, %c0_5] : memref<1x1xf32, #tpu.memory_space<vmem>>, vector<1x1xf32>
    %7 = arith.mulf %5, %5 : vector<8x256xf32>
    %8 = vector.shape_cast %7 : vector<8x256xf32> to vector<1x8x256xf32>
    %cst = arith.constant dense<0.000000e+00> : vector<1xf32>
    %9 = vector.multi_reduction <add>, %8, %cst [1, 2] : vector<1x8x256xf32> to vector<1xf32>
    %10 = vector.shape_cast %9 : vector<1xf32> to vector<1x1x1xf32>
    %11 = vector.extract %10[0, 0, 0] : f32 from vector<1x1x1xf32>
    %12 = vector.broadcast %11 : f32 to vector<1x1xf32>
    %13 = arith.addf %6, %12 : vector<1x1xf32>
    %c0_6 = arith.constant 0 : index
    %c0_7 = arith.constant 0 : index
    %14 = vector.load %arg4[%c0_6, %c0_7] : memref<1x1xf32, #tpu.memory_space<vmem>>, vector<1x1xf32>
    tpu.vector_store %arg4[%c0_6, %c0_7], %13 {strides = array<i32>} : memref<1x1xf32, #tpu.memory_space<vmem>>, vector<1x1xf32>,
    %c0_i32_8 = arith.constant 0 : i32
    %15 = arith.cmpi eq, %arg0, %c0_i32_8 : i32
    %16 = arith.extui %15 : i1 to i32
    %c0_i32_9 = arith.constant 0 : i32
    %17 = arith.cmpi ne, %16, %c0_i32_9 : i32
    scf.if %17 {
      %c0_10 = arith.constant 0 : index
      %c0_11 = arith.constant 0 : index
      %18 = vector.load %arg4[%c0_10, %c0_11] : memref<1x1xf32, #tpu.memory_space<vmem>>, vector<1x1xf32>
      %cst_12 = arith.constant 4.8828125E-4 : f32
      %19 = vector.broadcast %cst_12 : f32 to vector<1x1xf32>
      %20 = arith.mulf %18, %19 : vector<1x1xf32>
      %c0_13 = arith.constant 0 : index
      %c0_14 = arith.constant 0 : index
      %21 = vector.load %arg3[%c0_13, %c0_14] : memref<1x1xf32, #tpu.memory_space<vmem>>, vector<1x1xf32>
      tpu.vector_store %arg3[%c0_13, %c0_14], %20 {strides = array<i32>} : memref<1x1xf32, #tpu.memory_space<vmem>>, vector<1x1xf32>,
    } else {
    }
    return
  }
  func.func @transform_0(%arg0: i32) -> (i32, i32) {
    %c0_i32 = arith.constant 0 : i32
    %c0_i32_0 = arith.constant 0 : i32
    return %arg0, %c0_i32 : i32, i32
  }
  func.func @transform_1(%arg0: i32) -> (i32, i32) {
    %c0_i32 = arith.constant 0 : i32
    %c0_i32_0 = arith.constant 0 : i32
    return %arg0, %c0_i32 : i32, i32
  }
  func.func @transform_2(%arg0: i32) -> (i32, i32) {
    %c0_i32 = arith.constant 0 : i32
    %c0_i32_0 = arith.constant 0 : i32
    %c0_i32_1 = arith.constant 0 : i32
    return %c0_i32, %c0_i32_0 : i32, i32
  }
}

</mosaic_0001>

<llo_original>
// kernel: tpu_custom_call.1
$region0: #{tpu_custom_call.1}
  #allocation0 [shape = 'u32[]', space=smem, size = 0x4, offset = 0x4, fixed_abs, tag = 'smem constant byte address 0x4 - core index']
  #allocation1 [shape = 'u32[144,128]{1,0:T(1,128)}', space=vmem, size = 0x12000, scoped, tag = 'internal scratch']
  #allocation2 [shape = 'f32[1,1]{1,0:T(1,128)}', space=vmem, size = 0x200, scoped, tag = 'scratch operand']
  %s0 = inlined_call_operand.hbm [shape: f32[8,256], index: 0, kind: input, shape index: {}]
  %s1 = inlined_call_operand.hbm [shape: f32[8,256], index: 1, kind: input, shape index: {}]
  %s2 = inlined_call_operand.hbm [shape: f32[1,1], index: 2, kind: output, shape index: {}]
  %s3 = sld [smem:[#allocation0]]
  $region34: #{tpu_custom_call.1} parent=0
    _
  %s5 = ssub.s32 1, %s3
  %s6 = scalar_select 0, %s5, %s3
  $region1: #{tpu_custom_call.1} parent=0
    #allocation3 [shape = 'u8[8192]{0}', space=vmem, size = 0x2000, scoped, tag = 'input window, operand 0, single buffered']
    #allocation4 [shape = 's32[1]{0}', space=sflag, size = 0x4, scoped, tag = 'scoped memory for tpu_custom_call.1']
    #allocation5 [shape = 's32[1]{0}', space=sflag, size = 0x4, scoped, tag = 'scoped memory for tpu_custom_call.1']
    #allocation6 [shape = 'u8[8192]{0}', space=vmem, size = 0x2000, scoped, tag = 'input window, operand 1, single buffered']
    #allocation7 [shape = 's32[1]{0}', space=sflag, size = 0x4, scoped, tag = 'scoped memory for tpu_custom_call.1']
    #allocation8 [shape = 'u8[512]{0}', space=vmem, size = 0x400, scoped, tag = 'output window, operand 0, single buffered']
    %7 = vsyncpa [#allocation4], 0
    %8 = vsyncpa [#allocation7], 0
    %9 = vsyncpa [#allocation5], 0
    // Predicated region
    $region2: #{tpu_custom_call.1} parent=1 // pred_check
      _
    $region3: #{tpu_custom_call.1} parent=1 // pred_check_branch
      %11 = sbr.rel (0) target = $region5
    $region4: #{tpu_custom_call.1} parent=1 // pred_region
      %s13 = ssub.s32 256, 256
      %14 = vsyncadd [#allocation4], %s13
      %s16 = sshll.u32 [#allocation3], 4
      %s17 = int_to_ptr.vmem [resolvable:$true] %s16
      %19 = dma.hbm_to_vmem [thread:$0]  %s0, 256, %s17, [#allocation4]
    $region5: #{tpu_custom_call.1} parent=1 // pred_fallthru
      _
    // Predicated region
    $region6: #{tpu_custom_call.1} parent=1 // pred_check
      _
    $region7: #{tpu_custom_call.1} parent=1 // pred_check_branch
      %21 = sbr.rel (0) target = $region9
    $region8: #{tpu_custom_call.1} parent=1 // pred_region
      %s23 = ssub.s32 256, 256
      %24 = vsyncadd [#allocation7], %s23
      %s26 = sshll.u32 [#allocation6], 4
      %s27 = int_to_ptr.vmem [resolvable:$true] %s26
      %29 = dma.hbm_to_vmem [thread:$0]  %s1, 256, %s27, [#allocation7]
    $region9: #{tpu_custom_call.1} parent=1 // pred_fallthru
      _
    // Predicated region
    $region10: #{tpu_custom_call.1} parent=1 // pred_check
      _
    $region11: #{tpu_custom_call.1} parent=1 // pred_check_branch
      %31 = sbr.rel (0) target = $region13
    $region12: #{tpu_custom_call.1} parent=1 // pred_region
      %32 = dma.done [#allocation4], 256
    $region13: #{tpu_custom_call.1} parent=1 // pred_fallthru
      _
    // Predicated region
    $region14: #{tpu_custom_call.1} parent=1 // pred_check
      _
    $region15: #{tpu_custom_call.1} parent=1 // pred_check_branch
      %34 = sbr.rel (0) target = $region17
    $region16: #{tpu_custom_call.1} parent=1 // pred_region
      %35 = dma.done [#allocation7], 256
    $region17: #{tpu_custom_call.1} parent=1 // pred_fallthru
      _
    %p36 = scmp.eq.s32.totalorder 0, 0
    // Predicated region
    $region18: #{tpu_custom_call.1} parent=1 // pred_check
      %p37 = pneg %p36
    $region19: #{tpu_custom_call.1} parent=1 // pred_check_branch
      %39 = sbr.rel (%p37) target = $region21
    $region20: #{tpu_custom_call.1} parent=1 // pred_region
      %vm40 = vcmask 0
      %41 = vst.msk [vmem:[#allocation2] sm:$0x1] %vm40, 0.0
    $region21: #{tpu_custom_call.1} parent=1 // pred_fallthru
      _
    %v42 = vld [vmem:[#allocation3] sm:$0xff]
    %v43 = vld [vmem:[#allocation3 + $0x8] sm:$0xff]
    %v44 = vld [vmem:[#allocation6] sm:$0xff]
    %v45 = vld [vmem:[#allocation6 + $0x8] sm:$0xff]
    %v46 = vsub.f32 %v42, %v44
    %v47 = vsub.f32 %v43, %v45
    %v48 = vld [vmem:[#allocation2] sm:$0x1]
    %v49 = vmul.f32 %v46, %v46
    %v50 = vmul.f32 %v47, %v47
    %v51 = vadd.f32 %v49, %v50
    %52 = vadd.xlane.f32.xlu0 %v51
    %v53 = vpop.xlane.xlu0 %52
    %v54 = vrot.slane %v53, 4
    %v55 = vadd.f32 %v53, %v54
    %v56 = vrot.slane %v55, 2
    %v57 = vadd.f32 %v55, %v56
    %v58 = vrot.slane %v57, 1
    %v59 = vadd.f32 %v57, %v58
    %s60 = vtos %v59
    %v61 = vstv %s60
    %v62 = vadd.f32 %v48, %v61
    %vm63 = vcmask 0
    %64 = vst.msk [vmem:[#allocation2] sm:$0x1] %vm63, %v62
    // Predicated region
    $region22: #{tpu_custom_call.1} parent=1 // pred_check
      %p65 = pneg %p36
    $region23: #{tpu_custom_call.1} parent=1 // pred_check_branch
      %67 = sbr.rel (%p65) target = $region25
    $region24: #{tpu_custom_call.1} parent=1 // pred_region
      %v68 = vld [vmem:[#allocation2] sm:$0x1]
      %v69 = vmul.f32 %v68, 0.00048828125
      %70 = vst.msk [vmem:[#allocation8] sm:$0x1] %vm63, %v69
    $region25: #{tpu_custom_call.1} parent=1 // pred_fallthru
      _
    // Predicated region
    $region26: #{tpu_custom_call.1} parent=1 // pred_check
      _
    $region27: #{tpu_custom_call.1} parent=1 // pred_check_branch
      %72 = sbr.rel (0) target = $region29
    $region28: #{tpu_custom_call.1} parent=1 // pred_region
      %s74 = ssub.s32 16, 16
      %75 = vsyncadd [#allocation5], %s74
      %s77 = sshll.u32 [#allocation8], 4
      %s78 = int_to_ptr.vmem [resolvable:$true] %s77
      %80 = dma.vmem_to_hbm [thread:$0]  %s78, 16, %s2, [#allocation5]
    $region29: #{tpu_custom_call.1} parent=1 // pred_fallthru
      _
    // Predicated region
    $region30: #{tpu_custom_call.1} parent=1 // pred_check
      _
    $region31: #{tpu_custom_call.1} parent=1 // pred_check_branch
      %82 = sbr.rel (0) target = $region33
    $region32: #{tpu_custom_call.1} parent=1 // pred_region
      %83 = dma.done [#allocation5], 16
    $region33: #{tpu_custom_call.1} parent=1 // pred_fallthru
      _
    %84 = vsyncpa [#allocation4], 1
    %85 = vsyncpa [#allocation7], 1
    %86 = vsyncpa [#allocation5], 1

</llo_original>
